<compile_context>
chip_gen: v7x
topology: tpu7x:2x2x1
jax: 0.10.0
libtpu: 0.0.40
codegen_flags: <defaults>
</compile_context>

<pallas_src>
import functools
from math import log

import jax
import jax.numpy as jnp
from jax.experimental import pallas as pl
from jax.experimental.pallas import tpu as pltpu

DEF_L0 = log(10.0)
N_CORE_SPLIT = 2  # split the reduction across 2 TCs on v7x; no-op loop on v5e/v6e


def _penalized_uncertainty_kernel(y_pred_ref, g_ref, y_true_ref, out_ref, acc_ref, *, l0):
    i = pl.program_id(1)  # reduction step within this core-split

    @pl.when(i == 0)
    def _init():
        acc_ref[...] = jnp.zeros_like(acc_ref)

    logits = y_pred_ref[...].astype(jnp.float32)          # (TILE_N, C) f32
    g = g_ref[...].astype(jnp.float32)                    # (TILE_N, 1) f32
    labels = y_true_ref[...]                              # (TILE_N, 1) i32
    tn, c = logits.shape

    # Per-sample cross entropy from logits (criterion with reduction='none').
    m = jnp.max(logits, axis=-1, keepdims=True)                              # (TILE_N, 1)
    lse = jnp.log(jnp.sum(jnp.exp(logits - m), axis=-1, keepdims=True)) + m  # (TILE_N, 1)
    class_ids = jax.lax.broadcasted_iota(jnp.int32, (tn, c), 1)              # (TILE_N, C)
    true_logit = jnp.sum(
        jnp.where(class_ids == labels, logits, jnp.float32(0.0)),
        axis=-1, keepdims=True)                                              # (TILE_N, 1)
    ce = lse - true_logit                                                    # (TILE_N, 1)

    # Folded combine: g*ce + (1-g)*L0 == g*(ce - L0) + L0.  The constant N*L0
    # and the divide-by-N happen in the wrapper; zero-padded rows (g == 0)
    # contribute exactly 0 here.
    acc_ref[...] += jnp.sum(g * (ce - l0), keepdims=True)                    # (1, 1)

    @pl.when(i == pl.num_programs(1) - 1)
    def _finalize():
        out_ref[...] = jnp.broadcast_to(acc_ref[...], out_ref.shape)


def penalized_uncertainty_loss(y_pred, g, y_true, l0=DEF_L0, tile_n=None):
    """y_pred: (N, C) logits (any float dtype, kept native), g: (N,)/(N,1), y_true: (N,) int."""
    y_pred = jnp.asarray(y_pred)
    n, c = y_pred.shape
    g2 = jnp.asarray(g).reshape(n, 1).astype(jnp.float32)
    y2 = jnp.asarray(y_true).reshape(n, 1).astype(jnp.int32)

    elem = jnp.dtype(y_pred.dtype).itemsize
    # Sublane packing: 32-bit dtypes tile rows in 8s, 16-bit in 16s, 8-bit in 32s.
    row_mult = {4: 8, 2: 16, 1: 32}.get(elem, 8)

    if tile_n is None:
        # ~8 MiB logits block -> ~16 MiB double-buffered; fits v5e/v6e/v7x scoped VMEM.
        tile_n = (8 * 1024 * 1024) // max(1, c * elem)
    tile_n = max(row_mult, min(4096, (tile_n // row_mult) * row_mult))
    # Don't make the tile (and hence the padding) larger than half the batch.
    half = ((pl.cdiv(n, N_CORE_SPLIT) + row_mult - 1) // row_mult) * row_mult
    tile_n = min(tile_n, max(row_mult, half))

    chunk = N_CORE_SPLIT * tile_n
    n_pad = pl.cdiv(n, chunk) * chunk
    if n_pad != n:
        pad = n_pad - n
        y_pred = jnp.pad(y_pred, ((0, pad), (0, 0)))
        g2 = jnp.pad(g2, ((0, pad), (0, 0)))   # padded rows: g == 0 -> contribute 0
        y2 = jnp.pad(y2, ((0, pad), (0, 0)))
    nb = n_pad // chunk                        # reduction steps per core-split

    # Double-buffered inputs + output blocks + headroom; clamp to a safe range
    # (>= default scoped limit floor, well under v7x's 64 MiB physical VMEM).
    block_bytes = tile_n * (c * elem + 4 + 4) + 2 * 8 * 128 * 4
    vmem_bytes = int(min(48 * 1024 * 1024,
                         max(16 * 1024 * 1024, 2 * block_bytes + (4 << 20))))

    kernel = functools.partial(_penalized_uncertainty_kernel, l0=float(l0))

    out = pl.pallas_call(
        kernel,
        out_shape=jax.ShapeDtypeStruct((N_CORE_SPLIT * 8, 128), jnp.float32),
        grid_spec=pltpu.PrefetchScalarGridSpec(
            num_scalar_prefetch=0,
            grid=(N_CORE_SPLIT, nb),
            in_specs=[
                pl.BlockSpec((tile_n, c), lambda p, i: (p * nb + i, 0)),
                pl.BlockSpec((tile_n, 1), lambda p, i: (p * nb + i, 0)),
                pl.BlockSpec((tile_n, 1), lambda p, i: (p * nb + i, 0)),
            ],
            out_specs=pl.BlockSpec((8, 128), lambda p, i: (p, 0)),
            scratch_shapes=[pltpu.VMEM((1, 1), jnp.float32)],
        ),
        compiler_params=pltpu.CompilerParams(
            dimension_semantics=("parallel", "arbitrary"),
            vmem_limit_bytes=vmem_bytes,
        ),
    )(y_pred, g2, y2)

    partial = jnp.sum(out[::8, 0])             # one partial sum per core-split
    return (partial + jnp.float32(n) * jnp.float32(l0)) / jnp.float32(n)


def _reference(y_pred, g, y_true, l0=DEF_L0):
    """Pure-JAX reference mirroring the PyTorch forward."""
    lse = jax.nn.logsumexp(y_pred, axis=-1)
    true_logit = jnp.take_along_axis(y_pred, y_true[:, None], axis=-1)[:, 0]
    ce = lse - true_logit
    gf = g.reshape(-1)
    return jnp.mean(gf * ce + (1.0 - gf) * l0)


if __name__ == "__main__":
    key = jax.random.PRNGKey(0)
    k1, k2, k3 = jax.random.split(key, 3)

    # Primary small case: batch=8, classes=16, f32 logits.
    N, C = 8, 16
    y_pred = jax.random.normal(k1, (N, C), dtype=jnp.float32)
    g = jax.nn.sigmoid(jax.random.normal(k2, (N, 1), dtype=jnp.float32))
    y_true = jax.random.randint(k3, (N,), 0, C, dtype=jnp.int32)

    loss = jax.block_until_ready(penalized_uncertainty_loss(y_pred, g, y_true))
    ref = _reference(y_pred, g, y_true)
    assert jnp.allclose(loss, ref, atol=1e-5, rtol=1e-5), (loss, ref)

    # Multi-tile + ragged-padding + native-bf16 path (forced tiny tile).
    N2, C2 = 50, 16
    k4, k5, k6 = jax.random.split(jax.random.PRNGKey(1), 3)
    yp2 = jax.random.normal(k4, (N2, C2), dtype=jnp.bfloat16)
    g2 = jax.nn.sigmoid(jax.random.normal(k5, (N2,), dtype=jnp.float32))
    yt2 = jax.random.randint(k6, (N2,), 0, C2, dtype=jnp.int32)
    loss2 = jax.block_until_ready(penalized_uncertainty_loss(yp2, g2, yt2, tile_n=16))
    ref2 = _reference(yp2.astype(jnp.float32), g2, yt2)
    assert jnp.allclose(loss2, ref2, atol=1e-4, rtol=1e-4), (loss2, ref2)

    print("KERNEL_OK")
</pallas_src>

<mosaic_0001>
module attributes {stable_mosaic.version = 11 : i64} {
  func.func @_penalized_uncertainty_kernel(%arg0: i32, %arg1: i32, %arg2: memref<8x16xf32, #tpu.memory_space<vmem>>, %arg3: memref<8x1xf32, #tpu.memory_space<vmem>>, %arg4: memref<8x1xi32, #tpu.memory_space<vmem>>, %arg5: memref<8x128xf32, #tpu.memory_space<vmem>>, %arg6: memref<1x1xf32, #tpu.memory_space<vmem>>) attributes {dimension_semantics = [#tpu.dimension_semantics<parallel>, #tpu.dimension_semantics<arbitrary>], iteration_bounds = array<i64: 2, 1>, scalar_prefetch = 0 : i64, scratch_operands = 1 : i64, tpu.core_type = #tpu.core_type<tc>, window_params = [{transform_indices = @transform_0, window_bounds = array<i64: 8, 16>}, {transform_indices = @transform_1, window_bounds = array<i64: 8, 1>}, {transform_indices = @transform_2, window_bounds = array<i64: 8, 1>}, {transform_indices = @transform_3, window_bounds = array<i64: 8, 128>}]} {
    %c0_i32 = arith.constant 0 : i32
    %0 = arith.cmpi eq, %arg1, %c0_i32 : i32
    %1 = arith.extui %0 : i1 to i32
    %c0_i32_0 = arith.constant 0 : i32
    %2 = arith.cmpi ne, %1, %c0_i32_0 : i32
    scf.if %2 {
      %cst_17 = arith.constant 0.000000e+00 : f32
      %37 = vector.broadcast %cst_17 : f32 to vector<1x1xf32>
      %c0_18 = arith.constant 0 : index
      %c0_19 = arith.constant 0 : index
      %38 = vector.load %arg6[%c0_18, %c0_19] : memref<1x1xf32, #tpu.memory_space<vmem>>, vector<1x1xf32>
      tpu.vector_store %arg6[%c0_18, %c0_19], %37 {strides = array<i32>} : memref<1x1xf32, #tpu.memory_space<vmem>>, vector<1x1xf32>,
    } else {
    }
    %c0 = arith.constant 0 : index
    %c0_1 = arith.constant 0 : index
    %3 = vector.load %arg2[%c0, %c0_1] : memref<8x16xf32, #tpu.memory_space<vmem>>, vector<8x16xf32>
    %c0_2 = arith.constant 0 : index
    %c0_3 = arith.constant 0 : index
    %4 = vector.load %arg3[%c0_2, %c0_3] : memref<8x1xf32, #tpu.memory_space<vmem>>, vector<8x1xf32>
    %c0_4 = arith.constant 0 : index
    %c0_5 = arith.constant 0 : index
    %5 = vector.load %arg4[%c0_4, %c0_5] : memref<8x1xi32, #tpu.memory_space<vmem>>, vector<8x1xi32>
    %cst = arith.constant dense<0xFF800000> : vector<8xf32>
    %6 = vector.multi_reduction <maximumf>, %3, %cst [1] : vector<8x16xf32> to vector<8xf32>
    %7 = vector.shape_cast %6 : vector<8xf32> to vector<8x1xf32>
    %8 = vector.broadcast %7 : vector<8x1xf32> to vector<8x16xf32>
    %9 = arith.subf %3, %8 : vector<8x16xf32>
    %10 = math.exp %9 : vector<8x16xf32>
    %cst_6 = arith.constant dense<0.000000e+00> : vector<8xf32>
    %11 = vector.multi_reduction <add>, %10, %cst_6 [1] : vector<8x16xf32> to vector<8xf32>
    %12 = vector.shape_cast %11 : vector<8xf32> to vector<8x1xf32>
    %13 = math.log %12 : vector<8x1xf32>
    %14 = arith.addf %13, %7 : vector<8x1xf32>
    %15 = tpu.iota {dimensions = array<i32: 1>} : vector<8x16xi32>
    %16 = vector.broadcast %5 : vector<8x1xi32> to vector<8x16xi32>
    %17 = arith.cmpi eq, %15, %16 : vector<8x16xi32>
    %cst_7 = arith.constant 0.000000e+00 : f32
    %18 = vector.broadcast %cst_7 : f32 to vector<8x16xf32>
    %19 = arith.select %17, %3, %18 : vector<8x16xi1>, vector<8x16xf32>
    %cst_8 = arith.constant dense<0.000000e+00> : vector<8xf32>
    %20 = vector.multi_reduction <add>, %19, %cst_8 [1] : vector<8x16xf32> to vector<8xf32>
    %21 = vector.shape_cast %20 : vector<8xf32> to vector<8x1xf32>
    %22 = arith.subf %14, %21 : vector<8x1xf32>
    %c0_9 = arith.constant 0 : index
    %c0_10 = arith.constant 0 : index
    %23 = vector.load %arg6[%c0_9, %c0_10] : memref<1x1xf32, #tpu.memory_space<vmem>>, vector<1x1xf32>
    %cst_11 = arith.constant 2.30258512 : f32
    %24 = vector.broadcast %cst_11 : f32 to vector<8x1xf32>
    %25 = arith.subf %22, %24 : vector<8x1xf32>
    %26 = arith.mulf %4, %25 : vector<8x1xf32>
    %27 = vector.shape_cast %26 : vector<8x1xf32> to vector<1x8x1xf32>
    %cst_12 = arith.constant dense<0.000000e+00> : vector<1xf32>
    %28 = vector.multi_reduction <add>, %27, %cst_12 [1, 2] : vector<1x8x1xf32> to vector<1xf32>
    %29 = vector.shape_cast %28 : vector<1xf32> to vector<1x1x1xf32>
    %30 = vector.extract %29[0, 0, 0] : f32 from vector<1x1x1xf32>
    %31 = vector.broadcast %30 : f32 to vector<1x1xf32>
    %32 = arith.addf %23, %31 : vector<1x1xf32>
    %c0_13 = arith.constant 0 : index
    %c0_14 = arith.constant 0 : index
    %33 = vector.load %arg6[%c0_13, %c0_14] : memref<1x1xf32, #tpu.memory_space<vmem>>, vector<1x1xf32>
    tpu.vector_store %arg6[%c0_13, %c0_14], %32 {strides = array<i32>} : memref<1x1xf32, #tpu.memory_space<vmem>>, vector<1x1xf32>,
    %c0_i32_15 = arith.constant 0 : i32
    %34 = arith.cmpi eq, %arg1, %c0_i32_15 : i32
    %35 = arith.extui %34 : i1 to i32
    %c0_i32_16 = arith.constant 0 : i32
    %36 = arith.cmpi ne, %35, %c0_i32_16 : i32
    scf.if %36 {
      %c0_17 = arith.constant 0 : index
      %c0_18 = arith.constant 0 : index
      %37 = vector.load %arg6[%c0_17, %c0_18] : memref<1x1xf32, #tpu.memory_space<vmem>>, vector<1x1xf32>
      %38 = vector.shape_cast %37 : vector<1x1xf32> to vector<1x1xf32>
      %39 = vector.broadcast %38 : vector<1x1xf32> to vector<8x128xf32>
      %c0_19 = arith.constant 0 : index
      %c0_20 = arith.constant 0 : index
      %40 = vector.load %arg5[%c0_19, %c0_20] : memref<8x128xf32, #tpu.memory_space<vmem>>, vector<8x128xf32>
      tpu.vector_store %arg5[%c0_19, %c0_20], %39 {strides = array<i32>} : memref<8x128xf32, #tpu.memory_space<vmem>>, vector<8x128xf32>,
    } else {
    }
    return
  }
  func.func @transform_0(%arg0: i32, %arg1: i32) -> (i32, i32) {
    %c1_i32 = arith.constant 1 : i32
    %0 = arith.muli %arg0, %c1_i32 : i32
    %1 = arith.addi %0, %arg1 : i32
    %c0_i32 = arith.constant 0 : i32
    %c0_i32_0 = arith.constant 0 : i32
    return %1, %c0_i32 : i32, i32
  }
  func.func @transform_1(%arg0: i32, %arg1: i32) -> (i32, i32) {
    %c1_i32 = arith.constant 1 : i32
    %0 = arith.muli %arg0, %c1_i32 : i32
    %1 = arith.addi %0, %arg1 : i32
    %c0_i32 = arith.constant 0 : i32
    %c0_i32_0 = arith.constant 0 : i32
    return %1, %c0_i32 : i32, i32
  }
  func.func @transform_2(%arg0: i32, %arg1: i32) -> (i32, i32) {
    %c1_i32 = arith.constant 1 : i32
    %0 = arith.muli %arg0, %c1_i32 : i32
    %1 = arith.addi %0, %arg1 : i32
    %c0_i32 = arith.constant 0 : i32
    %c0_i32_0 = arith.constant 0 : i32
    return %1, %c0_i32 : i32, i32
  }
  func.func @transform_3(%arg0: i32, %arg1: i32) -> (i32, i32) {
    %c0_i32 = arith.constant 0 : i32
    %c0_i32_0 = arith.constant 0 : i32
    return %arg0, %c0_i32 : i32, i32
  }
}

</mosaic_0001>

<llo_original>
// kernel: tpu_custom_call.1
$region0: #{tpu_custom_call.1}
  #allocation0 [shape = 'u32[]', space=smem, size = 0x4, offset = 0x4, fixed_abs, tag = 'smem constant byte address 0x4 - core index']
  #allocation1 [shape = 'u32[144,128]{1,0:T(1,128)}', space=vmem, size = 0x12000, scoped, tag = 'internal scratch']
  #allocation2 [shape = 'f32[1,1]{1,0:T(1,128)}', space=vmem, size = 0x200, scoped, tag = 'scratch operand']
  %s0 = inlined_call_operand.vmem [shape: f32[16,16], index: 0, kind: input, shape index: {}]
  %s1 = inlined_call_operand.vmem [shape: f32[16,1], index: 1, kind: input, shape index: {}]
  %s2 = inlined_call_operand.vmem [shape: s32[16,1], index: 2, kind: input, shape index: {}]
  %s3 = inlined_call_operand.hbm [shape: f32[16,128], index: 3, kind: output, shape index: {}]
  %s4 = sld [smem:[#allocation0]]
  $region53: #{tpu_custom_call.1} parent=0
    _
  %s6 = ssub.s32 1, %s4
  %s7 = scalar_select 0, %s6, %s4
  $region1: #{tpu_custom_call.1} parent=0
    #allocation3 [shape = 'u8[8192]{0}', space=vmem, size = 0x2000, scoped, tag = 'output window, operand 0']
    #allocation4 [shape = 's32[2]{0}', space=sflag, size = 0x8, scoped, tag = 'scoped memory for tpu_custom_call.1']
    %8 = vsyncpa [#allocation4], 0
    %s9 = scalar_lea.sflag [#allocation4], 1
    %10 = vsyncpa %s9, 0
    loop: start=0, step=1, limit=4
    $region2: #{tpu_custom_call.1} parent=1 // loop_pre_header
      _
    $region3: #{tpu_custom_call.1} parent=1 // loop_header
      %s12 = sphi 0, %s16
      %p13 = scmp.ge.s32.totalorder %s12, 4
      %s19 = sphi 0, %s31
      %s20 = sphi 0, %s27
      %s21 = sphi 0, %s19
      %s22 = sphi 0, %s20
      %s23 = sphi 0, %s21
      %s24 = sphi 0, %s22
      %s36 = sphi 0, %s38
      %s39 = sphi 0, %s36
      %s40 = sphi 0, %s39
      %s56 = sphi 0, %s40
      %s64 = sphi 0, %s66
      %s67 = sphi 0, %s64
      %s68 = sphi 0, %s67
      %s84 = sphi 0, %s68
      %s92 = sphi 0, %s94
      %s95 = sphi 0, %s92
      %s96 = sphi 0, %s95
      %s112 = sphi 0, %s96
      %s118 = sphi 0, %s120
      %s121 = sphi 0, %s118
      %s122 = sphi 0, %s121
      %s138 = sphi 0, %s122
    $region4: #{tpu_custom_call.1} parent=1 // loop_header_branch
      %15 = sbr.rel (%p13) target = $region8
    $region5: #{tpu_custom_call.1} parent=1 // loop_body
      %s17 = ssub.s32 %s12, 1
      %s18 = ssub.s32 %s12, 2
      %s25 = sadd.s32 1, %s20
      %p26 = scmp.ge.s32.totalorder %s25, 1
      %s27 = scalar_select %p26, 0, %s25
      %s28 = sadd.s32 1, %s19
      %s29 = scalar_select %p26, %s28, %s19
      %p30 = scmp.ge.s32.totalorder %s29, 2
      %s31 = scalar_select %p30, 0, %s29
      %s32 = sadd.s32 %s19, %s20
      %s33 = sadd.s32 %s31, %s27
      %s34 = ssub.s32 %s32, %s33
      %p35 = scmp.eq.s32.totalorder %s34, 0
      %s37 = sadd.s32 %s36, 1
      %s38 = scalar_select %p35, %s36, %s37
      %p41 = pneg %p35
      %p42 = scmp.eq.s32.totalorder %s12, 1
      %p43 = por %p41, %p42
      %p44 = scmp.ne.s32.totalorder %s36, %s39
      %p45 = scmp.eq.s32.totalorder %s12, 0
      %p46 = por %p44, %p45
      %p47 = scmp.ne.s32.totalorder %s36, %s39
      %p48 = scmp.eq.s32.totalorder %s17, 1
      %p49 = por %p47, %p48
      %p50 = scmp.ne.s32.totalorder %s39, %s40
      %p51 = scmp.eq.s32.totalorder %s17, 0
      %p52 = por %p50, %p51
      %p53 = scmp.ne.s32.totalorder %s39, %s40
      %p54 = scmp.eq.s32.totalorder %s18, 1
      %p55 = por %p53, %p54
      %p57 = scmp.ne.s32.totalorder %s40, %s56
      %p58 = scmp.eq.s32.totalorder %s18, 0
      %p59 = por %p57, %p58
      %s60 = sadd.s32 %s19, %s20
      %s61 = sadd.s32 %s31, %s27
      %s62 = ssub.s32 %s60, %s61
      %p63 = scmp.eq.s32.totalorder %s62, 0
      %s65 = sadd.s32 %s64, 1
      %s66 = scalar_select %p63, %s64, %s65
      %p69 = pneg %p63
      %p70 = scmp.eq.s32.totalorder %s12, 1
      %p71 = por %p69, %p70
      %p72 = scmp.ne.s32.totalorder %s64, %s67
      %p73 = scmp.eq.s32.totalorder %s12, 0
      %p74 = por %p72, %p73
      %p75 = scmp.ne.s32.totalorder %s64, %s67
      %p76 = scmp.eq.s32.totalorder %s17, 1
      %p77 = por %p75, %p76
      %p78 = scmp.ne.s32.totalorder %s67, %s68
      %p79 = scmp.eq.s32.totalorder %s17, 0
      %p80 = por %p78, %p79
      %p81 = scmp.ne.s32.totalorder %s67, %s68
      %p82 = scmp.eq.s32.totalorder %s18, 1
      %p83 = por %p81, %p82
      %p85 = scmp.ne.s32.totalorder %s68, %s84
      %p86 = scmp.eq.s32.totalorder %s18, 0
      %p87 = por %p85, %p86
      %s88 = sadd.s32 %s19, %s20
      %s89 = sadd.s32 %s31, %s27
      %s90 = ssub.s32 %s88, %s89
      %p91 = scmp.eq.s32.totalorder %s90, 0
      %s93 = sadd.s32 %s92, 1
      %s94 = scalar_select %p91, %s92, %s93
      %p97 = pneg %p91
      %p98 = scmp.eq.s32.totalorder %s12, 1
      %p99 = por %p97, %p98
      %p100 = scmp.ne.s32.totalorder %s92, %s95
      %p101 = scmp.eq.s32.totalorder %s12, 0
      %p102 = por %p100, %p101
      %p103 = scmp.ne.s32.totalorder %s92, %s95
      %p104 = scmp.eq.s32.totalorder %s17, 1
      %p105 = por %p103, %p104
      %p106 = scmp.ne.s32.totalorder %s95, %s96
      %p107 = scmp.eq.s32.totalorder %s17, 0
      %p108 = por %p106, %p107
      %p109 = scmp.ne.s32.totalorder %s95, %s96
      %p110 = scmp.eq.s32.totalorder %s18, 1
      %p111 = por %p109, %p110
      %p113 = scmp.ne.s32.totalorder %s96, %s112
      %p114 = scmp.eq.s32.totalorder %s18, 0
      %p115 = por %p113, %p114
      %s116 = ssub.s32 %s19, %s31
      %p117 = scmp.eq.s32.totalorder %s116, 0
      %s119 = sadd.s32 %s118, 1
      %s120 = scalar_select %p117, %s118, %s119
      %p123 = pneg %p117
      %p124 = scmp.eq.s32.totalorder %s12, 1
      %p125 = por %p123, %p124
      %p126 = scmp.ne.s32.totalorder %s118, %s121
      %p127 = scmp.eq.s32.totalorder %s12, 0
      %p128 = por %p126, %p127
      %p129 = scmp.ne.s32.totalorder %s118, %s121
      %p130 = scmp.eq.s32.totalorder %s17, 1
      %p131 = por %p129, %p130
      %p132 = scmp.ne.s32.totalorder %s121, %s122
      %p133 = scmp.eq.s32.totalorder %s17, 0
      %p134 = por %p132, %p133
      %p135 = scmp.ne.s32.totalorder %s121, %s122
      %p136 = scmp.eq.s32.totalorder %s18, 1
      %p137 = por %p135, %p136
      %p139 = scmp.ne.s32.totalorder %s122, %s138
      %p140 = scmp.eq.s32.totalorder %s18, 0
      %p141 = por %p139, %p140
      %p142 = scmp.le.s32.totalorder 1, %s12
      %p143 = scmp.lt.s32.totalorder %s12, 3
      %p144 = pnand %p142, %p143
      %p145 = pneg %p144
      // Predicated region
      $region9: #{tpu_custom_call.1} parent=5 // pred_check
        _
      $region10: #{tpu_custom_call.1} parent=5 // pred_check_branch
        %147 = sbr.rel (%p144) target = $region12
      $region11: #{tpu_custom_call.1} parent=5 // pred_region
        %s148 = ssub.s32 %s12, 1
      $region12: #{tpu_custom_call.1} parent=5 // pred_fallthru
        _
      %p149 = scmp.lt.s32.totalorder %s12, 2
      // Predicated region
      $region13: #{tpu_custom_call.1} parent=5 // pred_check
        %p150 = pneg %p149
      $region14: #{tpu_custom_call.1} parent=5 // pred_check_branch
        %152 = sbr.rel (%p150) target = $region16
      $region15: #{tpu_custom_call.1} parent=5 // pred_region
        // Predicated region
        $region17: #{tpu_custom_call.1} parent=15 // pred_check
          %p153 = pneg %p46
        $region18: #{tpu_custom_call.1} parent=15 // pred_check_branch
          %155 = sbr.rel (%p153) target = $region20
        $region19: #{tpu_custom_call.1} parent=15 // pred_region
          %s156 = sadd.s32 %s19, %s20
          %p157 = scmp.lt.s32.totalorder %s156, 1
          %s158 = scalar_select %p157, %s156, 1
          %s159 = smul.addr %s158, 8
          %s160 = scalar_lea.vmem %s0, %s159
          %s161 = sadd.s32 %s19, %s20
        $region20: #{tpu_custom_call.1} parent=15 // pred_fallthru
          _
        // Predicated region
        $region21: #{tpu_custom_call.1} parent=15 // pred_check
          %p162 = pneg %p74
        $region22: #{tpu_custom_call.1} parent=15 // pred_check_branch
          %164 = sbr.rel (%p162) target = $region24
        $region23: #{tpu_custom_call.1} parent=15 // pred_region
          %s165 = sadd.s32 %s19, %s20
          %p166 = scmp.lt.s32.totalorder %s165, 1
          %s167 = scalar_select %p166, %s165, 1
          %s168 = smul.addr %s167, 8
          %s169 = scalar_lea.vmem %s1, %s168
          %s170 = sadd.s32 %s19, %s20
        $region24: #{tpu_custom_call.1} parent=15 // pred_fallthru
          _
        // Predicated region
        $region25: #{tpu_custom_call.1} parent=15 // pred_check
          %p171 = pneg %p102
        $region26: #{tpu_custom_call.1} parent=15 // pred_check_branch
          %173 = sbr.rel (%p171) target = $region28
        $region27: #{tpu_custom_call.1} parent=15 // pred_region
          %s174 = sadd.s32 %s19, %s20
          %p175 = scmp.lt.s32.totalorder %s174, 1
          %s176 = scalar_select %p175, %s174, 1
          %s177 = smul.addr %s176, 8
          %s178 = scalar_lea.vmem %s2, %s177
          %s179 = sadd.s32 %s19, %s20
        $region28: #{tpu_custom_call.1} parent=15 // pred_fallthru
          _
      $region16: #{tpu_custom_call.1} parent=5 // pred_fallthru
        _
      %p180 = scmp.le.s32.totalorder 1, %s12
      %p181 = scmp.lt.s32.totalorder %s12, 3
      %p182 = pnand %p180, %p181
      %p183 = pneg %p182
      // Predicated region
      $region29: #{tpu_custom_call.1} parent=5 // pred_check
        _
      $region30: #{tpu_custom_call.1} parent=5 // pred_check_branch
        %185 = sbr.rel (%p182) target = $region32
      $region31: #{tpu_custom_call.1} parent=5 // pred_region
        %s186 = ssub.s32 %s12, 1
        %s187 = sadd.s32 %s21, %s22
        %p188 = scmp.lt.s32.totalorder %s187, 1
        %s189 = scalar_select %p188, %s187, 1
        %s190 = smul.addr %s189, 8
        %s191 = scalar_lea.vmem %s0, %s190
        %p192 = pneg %p52
        %p193 = pneg %p49
        %s194 = sadd.s32 %s21, %s22
        %p195 = scmp.lt.s32.totalorder %s194, 1
        %s196 = scalar_select %p195, %s194, 1
        %s197 = smul.addr %s196, 8
        %s198 = scalar_lea.vmem %s1, %s197
        %p199 = pneg %p80
        %p200 = pneg %p77
        %s201 = sadd.s32 %s21, %s22
        %p202 = scmp.lt.s32.totalorder %s201, 1
        %s203 = scalar_select %p202, %s201, 1
        %s204 = smul.addr %s203, 8
        %s205 = scalar_lea.vmem %s2, %s204
        %p206 = pneg %p108
        %p207 = pneg %p105
        %p208 = pneg %p134
        %p209 = pneg %p131
        %s210 = sand.u32 %s121, 1
        %s211 = scalar_lea.sflag [#allocation4], %s210
        %s212 = sand.u32 %s121, 1
        %s213 = smul.addr %s212, 8
        %s214 = scalar_lea.vmem [#allocation3], %s213
        %s215 = sadd.s32 %s21, %s22
        %p216 = scmp.lt.s32.totalorder %s215, 1
        %s217 = scalar_select %p216, %s215, 1
        %s218 = smul.addr %s217, 8
        %s219 = scalar_lea.vmem %s0, %s218
        %s220 = sadd.s32 %s21, %s22
        %s221 = sadd.s32 %s21, %s22
        %p222 = scmp.lt.s32.totalorder %s221, 1
        %s223 = scalar_select %p222, %s221, 1
        %s224 = smul.addr %s223, 8
        %s225 = scalar_lea.vmem %s1, %s224
        %s226 = sadd.s32 %s21, %s22
        %s227 = sadd.s32 %s21, %s22
        %p228 = scmp.lt.s32.totalorder %s227, 1
        %s229 = scalar_select %p228, %s227, 1
        %s230 = smul.addr %s229, 8
        %s231 = scalar_lea.vmem %s2, %s230
        %s232 = sadd.s32 %s21, %s22
        %p233 = scmp.eq.s32.totalorder %s22, 0
        // Predicated region
        $region33: #{tpu_custom_call.1} parent=31 // pred_check
          %p234 = pneg %p233
        $region34: #{tpu_custom_call.1} parent=31 // pred_check_branch
          %236 = sbr.rel (%p234) target = $region36
        $region35: #{tpu_custom_call.1} parent=31 // pred_region
          %vm237 = vcmask 0
          %238 = vst.msk [vmem:[#allocation2] sm:$0x1] %vm237, 0.0
        $region36: #{tpu_custom_call.1} parent=31 // pred_fallthru
          _
        %v239 = vld [vmem:[%s219] sm:$0xff]
        %v240 = vld [vmem:[%s225] sm:$0xff]
        %v241 = vld [vmem:[%s231] sm:$0xff]
        %vm242 = vcmask 130048
        %v243 = vsel %vm242, %v239, -inf
        %244 = vmax.xlane.f32.xlu0 %v243
        %v245 = vpop.xlane.xlu0 %244
        %v246 = vsub.f32 %v239, %v245
        %v247 = vmul.f32 %v246, 1.442695
        %v248 = vpow.pop %v247
        %v249 = vsel %vm242, %v248, 0.0
        %250 = vadd.xlane.f32.xlu0 %v249
        %v251 = vpop.xlane.xlu0 %250
        %v252 = vlog2.pop %v251
        %v253 = vmul.f32 %v252, 0.6931472
        %v254 = vadd.f32 %v253, %v245
        %v255 = vlaneseq
        %v256 = vand.u32 %v255, 127
        %257 = vset.pattern.permute.xlu0 0
        %258 = vperm.xlu0 %257, %v241
        %v259 = vpop.permute.xlu0 %258
        %vm260 = vcmp.eq.s32.totalorder %v256, %v259
        %v261 = vsel %vm260, %v239, 0.0
        %v262 = vsel %vm242, %v261, 0.0
        %263 = vadd.xlane.f32.xlu0 %v262
        %v264 = vpop.xlane.xlu0 %263
        %v265 = vsub.f32 %v254, %v264
        %v266 = vld [vmem:[#allocation2] sm:$0x1]
        %v267 = vsub.f32 %v265, 2.3025851
        %v268 = vmul.f32 %v240, %v267
        %vm269 = vcmask 7168
        %v270 = vsel %vm269, %v268, 0.0
        %271 = vadd.xlane.f32.xlu0 %v270
        %v272 = vpop.xlane.xlu0 %271
        %v273 = vrot.slane %v272, 4
        %v274 = vadd.f32 %v272, %v273
        %v275 = vrot.slane %v274, 2
        %v276 = vadd.f32 %v274, %v275
        %v277 = vrot.slane %v276, 1
        %v278 = vadd.f32 %v276, %v277
        %s279 = vtos %v278
        %v280 = vstv %s279
        %v281 = vadd.f32 %v266, %v280
        %vm282 = vcmask 0
        %283 = vst.msk [vmem:[#allocation2] sm:$0x1] %vm282, %v281
        // Predicated region
        $region37: #{tpu_custom_call.1} parent=31 // pred_check
          %p284 = pneg %p233
        $region38: #{tpu_custom_call.1} parent=31 // pred_check_branch
          %286 = sbr.rel (%p284) target = $region40
        $region39: #{tpu_custom_call.1} parent=31 // pred_region
          %v287 = vld [vmem:[#allocation2] sm:$0x1]
          %v289 = vlaneseq
          %v290 = vshrl.u32 %v289, 7
          %v291 = vsub.s32 0, %v290
          %v292 = vrot.slane %v287, %v291
          %293 = vset.pattern.permute.xlu0 0
          %294 = vperm.xlu0 %293, %v292
          %v295 = vpop.permute.xlu0 %294
          %297 = vst [vmem:[%s214] sm:$0xff] %v295
        $region40: #{tpu_custom_call.1} parent=31 // pred_fallthru
          _
        %s298 = sand.u32 %s121, 1
        %s299 = scalar_lea.sflag [#allocation4], %s298
        %s300 = sand.u32 %s121, 1
        %s301 = smul.addr %s300, 8
        %s302 = scalar_lea.vmem [#allocation3], %s301
        // Predicated region
        $region41: #{tpu_custom_call.1} parent=31 // pred_check
          %p303 = pneg %p131
        $region42: #{tpu_custom_call.1} parent=31 // pred_check_branch
          %305 = sbr.rel (%p303) target = $region44
        $region43: #{tpu_custom_call.1} parent=31 // pred_region
          %s307 = ssub.s32 128, 128
          %308 = vsyncadd %s299, %s307
          %s309 = smul.addr %s21, 128
          %s310 = scalar_lea.hbm %s3, %s309
          %s312 = sshll.u32 %s302, 4
          %s313 = int_to_ptr.vmem [resolvable:$true] %s312
          %315 = dma.vmem_to_hbm [thread:$0]  %s313, 128, %s310, %s299
        $region44: #{tpu_custom_call.1} parent=31 // pred_fallthru
          _
      $region32: #{tpu_custom_call.1} parent=5 // pred_fallthru
        _
      %p316 = scmp.le.s32.totalorder 2, %s12
      // Predicated region
      $region45: #{tpu_custom_call.1} parent=5 // pred_check
        %p317 = pneg %p316
      $region46: #{tpu_custom_call.1} parent=5 // pred_check_branch
        %319 = sbr.rel (%p317) target = $region48
      $region47: #{tpu_custom_call.1} parent=5 // pred_region
        %s320 = ssub.s32 %s12, 2
        // Predicated region
        $region49: #{tpu_custom_call.1} parent=47 // pred_check
          %p321 = pneg %p137
        $region50: #{tpu_custom_call.1} parent=47 // pred_check_branch
          %323 = sbr.rel (%p321) target = $region52
        $region51: #{tpu_custom_call.1} parent=47 // pred_region
          %s324 = sand.u32 %s122, 1
          %s325 = scalar_lea.sflag [#allocation4], %s324
          %s326 = sand.u32 %s122, 1
          %s327 = smul.addr %s326, 8
          %s328 = scalar_lea.vmem [#allocation3], %s327
          %329 = dma.done %s325, 128
        $region52: #{tpu_custom_call.1} parent=47 // pred_fallthru
          _
      $region48: #{tpu_custom_call.1} parent=5 // pred_fallthru
        _
    $region6: #{tpu_custom_call.1} parent=1 // loop_footer
      %s16 = sadd.s32 1, %s12
    $region7: #{tpu_custom_call.1} parent=1 // loop_footer_branch
      %11 = sbr.rel target = $region3
    $region8: #{tpu_custom_call.1} parent=1 // loop_exit
      _
    %330 = vsyncpa [#allocation4], 1
    %s331 = scalar_lea.sflag [#allocation4], 1
    %332 = vsyncpa %s331, 1

</llo_original>
